<compile_context>
chip_gen: v7x
topology: tpu7x:2x2x1
jax: 0.10.0
libtpu: 0.0.40
codegen_flags: <defaults>
</compile_context>

<pallas_src>
import math

import jax
import jax.numpy as jnp
from jax.experimental import pallas as pl
from jax.experimental.pallas import tpu as pltpu


# ---------------------------------------------------------------------------
# Kernel A: resident-weight linear.  y = x @ Wt + b  (Wt stays in VMEM).
# ---------------------------------------------------------------------------
def _linear_resident_kernel(x_ref, wt_ref, b_ref, o_ref):
    # x_ref:  (TM, Dp)   activation tile
    # wt_ref: (Dp, Dp)   transposed (and possibly block-diag packed) weight
    # b_ref:  (1,  Dp)   bias (possibly tiled)
    # o_ref:  (TM, Dp)
    acc = jnp.dot(x_ref[...], wt_ref[...], preferred_element_type=jnp.float32)
    acc = acc + b_ref[...].astype(jnp.float32)
    o_ref[...] = acc.astype(o_ref.dtype)


def _linear_resident(x2, wt, b2, *, tm):
    """x2: [M, Dp], wt: [Dp, Dp], b2: [1, Dp] -> [M, Dp]."""
    M, d_in = x2.shape
    d_out = wt.shape[1]

    tm = max(8, (tm // 8) * 8)
    if M <= 8:
        tm_eff = M                      # single tiny block (full extent)
    else:
        # Force >=2 grid steps (so both v7x TensorCores get work) while never
        # exceeding the requested tile; first block dim stays a multiple of 8.
        half = ((pl.cdiv(M, 2) + 7) // 8) * 8
        tm_eff = min(tm, half)
    grid = (pl.cdiv(M, tm_eff),)

    # Scoped-VMEM budget: single-buffered weight/bias + double-buffered x/y
    # tiles (+ headroom in case the compiler keeps two weight copies anyway).
    x_item = jnp.dtype(x2.dtype).itemsize
    w_item = jnp.dtype(wt.dtype).itemsize
    needed = (2 * d_in * d_out * w_item
              + 2 * d_out * w_item
              + 2 * tm_eff * (d_in + d_out) * x_item
              + (2 << 20))
    vmem_limit = int(min(max(needed, 32 << 20), 60 << 20))

    return pl.pallas_call(
        _linear_resident_kernel,
        out_shape=jax.ShapeDtypeStruct((M, d_out), x2.dtype),
        grid_spec=pltpu.PrefetchScalarGridSpec(
            num_scalar_prefetch=0,
            grid=grid,
            in_specs=[
                # x tile marches along M (double-buffered by default).
                pl.BlockSpec((tm_eff, d_in), lambda i: (i, 0)),
                # Weight / bias: constant block index -> DMA'd once; single
                # buffer since the block never changes.
                pl.BlockSpec((d_in, d_out), lambda i: (0, 0),
                             pipeline_mode=pl.Buffered(1)),
                pl.BlockSpec((1, d_out), lambda i: (0, 0),
                             pipeline_mode=pl.Buffered(1)),
            ],
            out_specs=pl.BlockSpec((tm_eff, d_out), lambda i: (i, 0)),
        ),
        compiler_params=pltpu.CompilerParams(
            dimension_semantics=("parallel",),
            vmem_limit_bytes=vmem_limit,
        ),
    )(x2, wt, b2)


# ---------------------------------------------------------------------------
# Kernel B: large-D tiled matmul with a VMEM f32 accumulator.
# ---------------------------------------------------------------------------
def _linear_tiled_kernel(x_ref, wt_ref, b_ref, o_ref, acc_ref):
    k = pl.program_id(2)

    @pl.when(k == 0)
    def _():
        acc_ref[...] = jnp.zeros_like(acc_ref)

    acc_ref[...] += jnp.dot(x_ref[...], wt_ref[...],
                            preferred_element_type=jnp.float32)

    @pl.when(k == pl.num_programs(2) - 1)
    def _():
        o_ref[...] = (acc_ref[...]
                      + b_ref[...].astype(jnp.float32)).astype(o_ref.dtype)


def _linear_tiled(x2, wt, b2, *, tm=512, tn=256, tk=256):
    """Large-D path: weight streamed in (tk, tn) tiles, f32 accumulator."""
    M, K = x2.shape
    N = wt.shape[1]
    assert K % tk == 0 and N % tn == 0

    tm = max(8, (tm // 8) * 8)
    tm_eff = M if M <= tm else tm
    grid = (pl.cdiv(M, tm_eff), N // tn, K // tk)

    x_item = jnp.dtype(x2.dtype).itemsize
    w_item = jnp.dtype(wt.dtype).itemsize
    needed = (2 * tm_eff * tk * x_item + 2 * tk * tn * w_item
              + 2 * tm_eff * tn * x_item + tm_eff * tn * 4
              + 2 * tn * w_item + (2 << 20))
    vmem_limit = int(min(max(needed, 32 << 20), 60 << 20))

    return pl.pallas_call(
        _linear_tiled_kernel,
        out_shape=jax.ShapeDtypeStruct((M, N), x2.dtype),
        grid_spec=pltpu.PrefetchScalarGridSpec(
            num_scalar_prefetch=0,
            grid=grid,
            in_specs=[
                pl.BlockSpec((tm_eff, tk), lambda i, j, k: (i, k)),
                pl.BlockSpec((tk, tn), lambda i, j, k: (k, j)),
                pl.BlockSpec((1, tn), lambda i, j, k: (0, j)),
            ],
            out_specs=pl.BlockSpec((tm_eff, tn), lambda i, j, k: (i, j)),
            scratch_shapes=[pltpu.VMEM((tm_eff, tn), jnp.float32)],
        ),
        compiler_params=pltpu.CompilerParams(
            dimension_semantics=("parallel", "parallel", "arbitrary"),
            vmem_limit_bytes=vmem_limit,
        ),
    )(x2, wt, b2)


def _linear_pallas(x2, wt, b2, *, tm=2048):
    d_in, d_out = wt.shape
    if d_in >= 1024 and d_in % 256 == 0 and d_out % 256 == 0:
        return _linear_tiled(x2, wt, b2)
    return _linear_resident(x2, wt, b2, tm=tm)


# ---------------------------------------------------------------------------
# One-time (init-time) parameter packing — keeps weight.T / kron / dtype casts
# out of the hot path.
# ---------------------------------------------------------------------------
def pack_temporal_fc_params(weight, bias, dtype=None):
    """weight: [D, D] (nn.Linear [out, in]); bias: [D].

    Returns (wt_packed, bias_packed, pack_factor). When D is not a multiple of
    128 and the smallest P with (P*D) % 128 == 0 keeps P*D <= 512, the weight
    is packed block-diagonally so kernel rows are lane-dense.
    """
    D = weight.shape[0]
    if dtype is None:
        dtype = weight.dtype
    wt = weight.T.astype(dtype)              # [in, out]  ->  y = x @ wt
    b = bias.astype(dtype)

    pack = 1
    if D % 128 != 0:
        p = 128 // math.gcd(D, 128)          # smallest P with (P*D) % 128 == 0
        if p > 1 and p * D <= 512:
            pack = p

    if pack > 1:
        eye = jnp.eye(pack, dtype=dtype)
        wt_packed = jnp.kron(eye, wt)                       # [P*D, P*D]
        b_packed = jnp.tile(b, pack).reshape(1, pack * D)   # [1,  P*D]
        return wt_packed, b_packed, pack
    return wt, b.reshape(1, D), 1


# ---------------------------------------------------------------------------
# Hot-path forward: y = x @ W.T + b over the last axis of x.
# ---------------------------------------------------------------------------
def temporal_fc_apply(x, wt_packed, bias_packed, pack, *, tm=2048):
    D = x.shape[-1]
    lead = x.shape[:-1]
    x2 = x.reshape(-1, D)
    M = x2.shape[0]

    if pack > 1:
        M_main = (M // pack) * pack
        outs = []
        if M_main:
            x_main = x2 if M_main == M else x2[:M_main]
            xp = x_main.reshape(M_main // pack, pack * D)   # row-major view
            yp = _linear_pallas(xp, wt_packed, bias_packed, tm=tm)
            outs.append(yp.reshape(M_main, D))
        if M_main < M:
            # <= pack-1 leftover rows: tiny jnp matmul against the first
            # diagonal block (== W.T) instead of padding a full HBM pass.
            y_rem = x2[M_main:] @ wt_packed[:D, :D] + bias_packed[:, :D]
            outs.append(y_rem.astype(x2.dtype))
        y2 = outs[0] if len(outs) == 1 else jnp.concatenate(outs, axis=0)
    else:
        y2 = _linear_pallas(x2, wt_packed, bias_packed, tm=tm)

    return y2.reshape(*lead, D)


def temporal_fc(x, weight, bias, *, tm=2048):
    """Convenience wrapper matching Temporal_FC.forward (packs params per call;
    in a real model call pack_temporal_fc_params once at init)."""
    wt_p, b_p, pack = pack_temporal_fc_params(weight, bias, dtype=x.dtype)
    return temporal_fc_apply(x, wt_p, b_p, pack, tm=tm)


if __name__ == "__main__":
    key = jax.random.PRNGKey(0)

    def ref_linear(x, w, b):
        return jnp.dot(x, w.T, precision=jax.lax.Precision.HIGHEST) + b

    def run_case(k, lead_shape, d, tol):
        kx, kw, kb = jax.random.split(k, 3)
        x = jax.random.normal(kx, (*lead_shape, d), dtype=jnp.float32)
        bound = 1.0 / jnp.sqrt(jnp.float32(d))
        w = jax.random.uniform(kw, (d, d), jnp.float32, -bound, bound)
        b = jax.random.uniform(kb, (d,), jnp.float32, -bound, bound)

        wt_p, b_p, pack = pack_temporal_fc_params(w, b, dtype=x.dtype)
        y = jax.block_until_ready(temporal_fc_apply(x, wt_p, b_p, pack))

        y_ref = ref_linear(x, w, b)
        assert y.shape == x.shape
        err = jnp.max(jnp.abs(y - y_ref))
        assert jnp.allclose(y, y_ref, atol=tol, rtol=tol), f"D={d}: max err {err}"

    k0, k1, k2, k3 = jax.random.split(key, 4)
    # Primary case: B=2, T=8, dim=32 — lane-dense packed (P=4 -> 128 lanes).
    run_case(k0, (2, 8), 32, 1e-5)
    # Non-divisor dim with a ragged M remainder (P=8 -> 384 lanes, 7 leftovers).
    run_case(k1, (3, 5), 48, 1e-5)
    # dim multiple of 128: unpacked resident weight, >=2 grid steps.
    run_case(k2, (4, 16), 256, 1e-4)
    # Large dim: (i, j, k) tiled path with f32 VMEM accumulator.
    run_case(k3, (2, 8), 1024, 1e-2)

    print("KERNEL_OK")
</pallas_src>

<mosaic_0001>
module attributes {stable_mosaic.version = 11 : i64} {
  func.func @_linear_resident_kernel(%arg0: i32, %arg1: memref<4x128xf32, #tpu.memory_space<vmem>>, %arg2: memref<128x128xf32, #tpu.memory_space<vmem>>, %arg3: memref<1x128xf32, #tpu.memory_space<vmem>>, %arg4: memref<4x128xf32, #tpu.memory_space<vmem>>) attributes {dimension_semantics = [#tpu.dimension_semantics<parallel>], iteration_bounds = array<i64: 1>, scalar_prefetch = 0 : i64, scratch_operands = 0 : i64, tpu.core_type = #tpu.core_type<tc>, window_params = [{transform_indices = @transform_0, window_bounds = array<i64: 4, 128>}, {pipeline_mode = #tpu.pipeline_mode<synchronous>, transform_indices = @transform_1, window_bounds = array<i64: 128, 128>}, {pipeline_mode = #tpu.pipeline_mode<synchronous>, transform_indices = @transform_2, window_bounds = array<i64: 1, 128>}, {transform_indices = @transform_3, window_bounds = array<i64: 4, 128>}]} {
    %c0 = arith.constant 0 : index
    %c0_0 = arith.constant 0 : index
    %0 = vector.load %arg1[%c0, %c0_0] : memref<4x128xf32, #tpu.memory_space<vmem>>, vector<4x128xf32>
    %c0_1 = arith.constant 0 : index
    %c0_2 = arith.constant 0 : index
    %1 = vector.load %arg2[%c0_1, %c0_2] : memref<128x128xf32, #tpu.memory_space<vmem>>, vector<128x128xf32>
    %cst = arith.constant dense<0.000000e+00> : vector<4x128xf32>
    %2 = tpu.matmul %0, %1, %cst {dimension_numbers = #tpu.dot_dimension_numbers<[1], [0], [0], [1], [0, 0, 1, 1], [], []>} : vector<4x128xf32>, vector<128x128xf32>, vector<4x128xf32> -> vector<4x128xf32>
    %c0_3 = arith.constant 0 : index
    %c0_4 = arith.constant 0 : index
    %3 = vector.load %arg3[%c0_3, %c0_4] : memref<1x128xf32, #tpu.memory_space<vmem>>, vector<1x128xf32>
    %4 = vector.broadcast %3 : vector<1x128xf32> to vector<4x128xf32>
    %5 = arith.addf %2, %4 : vector<4x128xf32>
    %c0_5 = arith.constant 0 : index
    %c0_6 = arith.constant 0 : index
    %6 = vector.load %arg4[%c0_5, %c0_6] : memref<4x128xf32, #tpu.memory_space<vmem>>, vector<4x128xf32>
    tpu.vector_store %arg4[%c0_5, %c0_6], %5 {strides = array<i32>} : memref<4x128xf32, #tpu.memory_space<vmem>>, vector<4x128xf32>,
    return
  }
  func.func @transform_0(%arg0: i32) -> (i32, i32) {
    %c0_i32 = arith.constant 0 : i32
    %c0_i32_0 = arith.constant 0 : i32
    return %arg0, %c0_i32 : i32, i32
  }
  func.func @transform_1(%arg0: i32) -> (i32, i32) {
    %c0_i32 = arith.constant 0 : i32
    %c0_i32_0 = arith.constant 0 : i32
    %c0_i32_1 = arith.constant 0 : i32
    return %c0_i32, %c0_i32_0 : i32, i32
  }
  func.func @transform_2(%arg0: i32) -> (i32, i32) {
    %c0_i32 = arith.constant 0 : i32
    %c0_i32_0 = arith.constant 0 : i32
    %c0_i32_1 = arith.constant 0 : i32
    return %c0_i32, %c0_i32_0 : i32, i32
  }
  func.func @transform_3(%arg0: i32) -> (i32, i32) {
    %c0_i32 = arith.constant 0 : i32
    %c0_i32_0 = arith.constant 0 : i32
    return %arg0, %c0_i32 : i32, i32
  }
}

</mosaic_0001>

<llo_original>
// kernel: tpu_custom_call.1
$region0: #{tpu_custom_call.1}
  #allocation0 [shape = 'u32[]', space=smem, size = 0x4, offset = 0x4, fixed_abs, tag = 'smem constant byte address 0x4 - core index']
  #allocation1 [shape = 'u32[144,128]{1,0:T(1,128)}', space=vmem, size = 0x12000, scoped, tag = 'internal scratch']
  %s0 = inlined_call_operand.hbm [shape: f32[4,128], index: 0, kind: input, shape index: {}]
  %s1 = inlined_call_operand.hbm [shape: f32[128,128], index: 1, kind: input, shape index: {}]
  %s2 = inlined_call_operand.vmem [shape: f32[1,128], index: 2, kind: input, shape index: {}]
  %s3 = inlined_call_operand.hbm [shape: f32[4,128], index: 3, kind: output, shape index: {}]
  %s4 = sld [smem:[#allocation0]]
  $region30: #{tpu_custom_call.1} parent=0
    _
  %s6 = ssub.s32 1, %s4
  %s7 = scalar_select 0, %s6, %s4
  $region1: #{tpu_custom_call.1} parent=0
    #allocation2 [shape = 'u8[2048]{0}', space=vmem, size = 0x800, scoped, tag = 'input window, operand 0, single buffered']
    #allocation3 [shape = 's32[1]{0}', space=sflag, size = 0x4, scoped, tag = 'scoped memory for tpu_custom_call.1']
    #allocation4 [shape = 's32[1]{0}', space=sflag, size = 0x4, scoped, tag = 'scoped memory for tpu_custom_call.1']
    #allocation5 [shape = 'u8[65536]{0}', space=vmem, size = 0x10000, scoped, tag = 'input window, operand 1, single buffered']
    #allocation6 [shape = 's32[1]{0}', space=sflag, size = 0x4, scoped, tag = 'scoped memory for tpu_custom_call.1']
    #allocation7 [shape = 'u8[2048]{0}', space=vmem, size = 0x800, scoped, tag = 'output window, operand 0, single buffered']
    %8 = vsyncpa [#allocation3], 0
    %9 = vsyncpa [#allocation6], 0
    %10 = vsyncpa [#allocation4], 0
    // Predicated region
    $region2: #{tpu_custom_call.1} parent=1 // pred_check
      _
    $region3: #{tpu_custom_call.1} parent=1 // pred_check_branch
      %12 = sbr.rel (0) target = $region5
    $region4: #{tpu_custom_call.1} parent=1 // pred_region
      %s14 = ssub.s32 64, 64
      %15 = vsyncadd [#allocation3], %s14
      %s17 = sshll.u32 [#allocation2], 4
      %s18 = int_to_ptr.vmem [resolvable:$true] %s17
      %20 = dma.hbm_to_vmem [thread:$0]  %s0, 64, %s18, [#allocation3]
    $region5: #{tpu_custom_call.1} parent=1 // pred_fallthru
      _
    // Predicated region
    $region6: #{tpu_custom_call.1} parent=1 // pred_check
      _
    $region7: #{tpu_custom_call.1} parent=1 // pred_check_branch
      %22 = sbr.rel (0) target = $region9
    $region8: #{tpu_custom_call.1} parent=1 // pred_region
      %s24 = ssub.s32 2048, 2048
      %25 = vsyncadd [#allocation6], %s24
      %s26 = sshll.u32 [#allocation5], 4
      %s27 = int_to_ptr.vmem [resolvable:$true] %s26
      %32 = dma.hbm_to_vmem [thread:$0]  %s1, 2048, %s27, [#allocation6], 128, 128, 8
    $region9: #{tpu_custom_call.1} parent=1 // pred_fallthru
      _
    // Predicated region
    $region10: #{tpu_custom_call.1} parent=1 // pred_check
      _
    $region11: #{tpu_custom_call.1} parent=1 // pred_check_branch
      %34 = sbr.rel (0) target = $region13
    $region12: #{tpu_custom_call.1} parent=1 // pred_region
      _
    $region13: #{tpu_custom_call.1} parent=1 // pred_fallthru
      _
    // Predicated region
    $region14: #{tpu_custom_call.1} parent=1 // pred_check
      _
    $region15: #{tpu_custom_call.1} parent=1 // pred_check_branch
      %36 = sbr.rel (0) target = $region17
    $region16: #{tpu_custom_call.1} parent=1 // pred_region
      %37 = dma.done [#allocation3], 64
    $region17: #{tpu_custom_call.1} parent=1 // pred_fallthru
      _
    // Predicated region
    $region18: #{tpu_custom_call.1} parent=1 // pred_check
      _
    $region19: #{tpu_custom_call.1} parent=1 // pred_check_branch
      %39 = sbr.rel (0) target = $region21
    $region20: #{tpu_custom_call.1} parent=1 // pred_region
      %40 = dma.done [#allocation6], 2048
    $region21: #{tpu_custom_call.1} parent=1 // pred_fallthru
      _
    %v41 = vld [vmem:[#allocation2] sm:$0xf]
    %v42 = vld [vmem:[#allocation5] sm:$0xff]
    %v43 = vld [vmem:[#allocation5 + $0x8] sm:$0xff]
    %v44 = vld [vmem:[#allocation5 + $0x10] sm:$0xff]
    %v45 = vld [vmem:[#allocation5 + $0x18] sm:$0xff]
    %v46 = vld [vmem:[#allocation5 + $0x20] sm:$0xff]
    %v47 = vld [vmem:[#allocation5 + $0x28] sm:$0xff]
    %v48 = vld [vmem:[#allocation5 + $0x30] sm:$0xff]
    %v49 = vld [vmem:[#allocation5 + $0x38] sm:$0xff]
    %v50 = vld [vmem:[#allocation5 + $0x40] sm:$0xff]
    %v51 = vld [vmem:[#allocation5 + $0x48] sm:$0xff]
    %v52 = vld [vmem:[#allocation5 + $0x50] sm:$0xff]
    %v53 = vld [vmem:[#allocation5 + $0x58] sm:$0xff]
    %v54 = vld [vmem:[#allocation5 + $0x60] sm:$0xff]
    %v55 = vld [vmem:[#allocation5 + $0x68] sm:$0xff]
    %v56 = vld [vmem:[#allocation5 + $0x70] sm:$0xff]
    %v57 = vld [vmem:[#allocation5 + $0x78] sm:$0xff]
    %v58 = vld [vmem:[%s2] sm:$0x1]
    %v60 = vlaneseq
    %v61 = vshrl.u32 %v60, 7
    %v62 = vsub.s32 0, %v61
    %v63 = vrot.slane %v58, %v62
    %65 = vmatprep.subr.mxu0 0.0
    %66 = vmatpush1.msra.mxu0 %v42
    %67 = vmatprep.subr.mxu0 0.0
    %68 = vmatpush1.msra.mxu0 %v43
    %69 = vmatprep.subr.mxu0 0.0
    %70 = vmatpush1.msra.mxu0 %v44
    %71 = vmatprep.subr.mxu0 0.0
    %72 = vmatpush1.msra.mxu0 %v45
    %73 = vmatprep.subr.mxu0 0.0
    %74 = vmatpush1.msra.mxu0 %v46
    %75 = vmatprep.subr.mxu0 0.0
    %76 = vmatpush1.msra.mxu0 %v47
    %77 = vmatprep.subr.mxu0 0.0
    %78 = vmatpush1.msra.mxu0 %v48
    %79 = vmatprep.subr.mxu0 0.0
    %80 = vmatpush1.msra.mxu0 %v49
    %81 = vmatprep.subr.mxu0 0.0
    %82 = vmatpush1.msra.mxu0 %v50
    %83 = vmatprep.subr.mxu0 0.0
    %84 = vmatpush1.msra.mxu0 %v51
    %85 = vmatprep.subr.mxu0 0.0
    %86 = vmatpush1.msra.mxu0 %v52
    %87 = vmatprep.subr.mxu0 0.0
    %88 = vmatpush1.msra.mxu0 %v53
    %89 = vmatprep.subr.mxu0 0.0
    %90 = vmatpush1.msra.mxu0 %v54
    %91 = vmatprep.subr.mxu0 0.0
    %92 = vmatpush1.msra.mxu0 %v55
    %93 = vmatprep.subr.mxu0 0.0
    %94 = vmatpush1.msra.mxu0 %v56
    %95 = vmatprep.subr.mxu0 0.0
    %96 = vmatpush1.msra.mxu0 %v57
    %97 = vmatprep.subr.mxu0 0.0
    %98 = vmatpush1.msra.mxu0 0.0
    %99 = vmatprep.subr.mxu0 0.0
    %100 = vmatpush1.msra.mxu0 0.0
    %101 = vmatprep.subr.mxu0 0.0
    %102 = vmatpush1.msra.mxu0 0.0
    %103 = vmatprep.subr.mxu0 0.0
    %104 = vmatpush1.msra.mxu0 0.0
    %105 = vmatprep.subr.mxu0 0.0
    %106 = vmatpush1.msra.mxu0 0.0
    %107 = vmatprep.subr.mxu0 0.0
    %108 = vmatpush1.msra.mxu0 0.0
    %109 = vmatprep.subr.mxu0 0.0
    %110 = vmatpush1.msra.mxu0 0.0
    %111 = vmatprep.subr.mxu0 0.0
    %112 = vmatpush1.msra.mxu0 0.0
    %113 = vmatprep.subr.mxu0 0.0
    %114 = vmatpush1.msra.mxu0 0.0
    %115 = vmatprep.subr.mxu0 0.0
    %116 = vmatpush1.msra.mxu0 0.0
    %117 = vmatprep.subr.mxu0 0.0
    %118 = vmatpush1.msra.mxu0 0.0
    %119 = vmatprep.subr.mxu0 0.0
    %120 = vmatpush1.msra.mxu0 0.0
    %121 = vmatprep.subr.mxu0 0.0
    %122 = vmatpush1.msra.mxu0 0.0
    %123 = vmatprep.subr.mxu0 0.0
    %124 = vmatpush1.msra.mxu0 0.0
    %125 = vmatprep.subr.mxu0 0.0
    %126 = vmatpush1.msra.mxu0 0.0
    %127 = vmatprep.subr.mxu0 0.0
    %128 = vmatpush1.msra.mxu0 0.0
    %129 = vmatprep.mubr.f32.mxu0 0.0
    %130 = vmatmul.mubr.f32.gmra.mrb[0].mxu0 %v41
    %v131 = vpop.f32.mrb[0].mxu0
    %v132 = vadd.f32 %v63, %v131
    %v133 = vpop.f32.mrb[0].mxu0
    %134 = vdwg.mxu0
    %135 = vst [vmem:[#allocation7] sm:$0xf] %v132
    // Predicated region
    $region22: #{tpu_custom_call.1} parent=1 // pred_check
      _
    $region23: #{tpu_custom_call.1} parent=1 // pred_check_branch
      %137 = sbr.rel (0) target = $region25
    $region24: #{tpu_custom_call.1} parent=1 // pred_region
      %s139 = ssub.s32 64, 64
      %140 = vsyncadd [#allocation4], %s139
      %s142 = sshll.u32 [#allocation7], 4
      %s143 = int_to_ptr.vmem [resolvable:$true] %s142
      %145 = dma.vmem_to_hbm [thread:$0]  %s143, 64, %s3, [#allocation4]
    $region25: #{tpu_custom_call.1} parent=1 // pred_fallthru
      _
    // Predicated region
    $region26: #{tpu_custom_call.1} parent=1 // pred_check
      _
    $region27: #{tpu_custom_call.1} parent=1 // pred_check_branch
      %147 = sbr.rel (0) target = $region29
    $region28: #{tpu_custom_call.1} parent=1 // pred_region
      %148 = dma.done [#allocation4], 64
    $region29: #{tpu_custom_call.1} parent=1 // pred_fallthru
      _
    %149 = vsyncpa [#allocation3], 1
    %150 = vsyncpa [#allocation6], 1
    %151 = vsyncpa [#allocation4], 1

</llo_original>
